<compile_context>
chip_gen: v7x
topology: tpu7x:2x2x1
jax: 0.10.0
libtpu: 0.0.40
codegen_flags: <defaults>
</compile_context>

<pallas_src>
import jax
import jax.numpy as jnp
from jax import lax
from jax.experimental import pallas as pl
from jax.experimental.pallas import tpu as pltpu


def _gcn_matmul_kernel(a_ref, x_ref, o_ref, acc_ref):
    """One (tm, tk) x (tk, tw) MXU tile of Y_wide = anorm @ X_wide."""
    @pl.when(pl.program_id(2) == 0)
    def _():
        acc_ref[...] = jnp.zeros_like(acc_ref)

    acc_ref[...] += jnp.dot(
        a_ref[...], x_ref[...], preferred_element_type=jnp.float32
    )

    @pl.when(pl.program_id(2) == pl.num_programs(2) - 1)
    def _():
        o_ref[...] = acc_ref[...].astype(o_ref.dtype)


def _pick_tile(dim, candidates):
    """Largest candidate tile that evenly divides `dim`, else full extent."""
    for c in candidates:
        if dim >= c and dim % c == 0:
            return c
    return dim  # full-extent block is always legal


def gcn_conv2d(x, adjmatrix):
    """x: (B, C, N, F), adjmatrix: (N, N)  ->  (B, C, N, F)."""
    B, C, N, F = x.shape
    assert adjmatrix.shape == (N, N)
    W = B * C * F

    # --- one-time normalization of the adjacency (wrapper, not hot loop) ---
    adj = adjmatrix.astype(jnp.float32)
    degree = jnp.sum(adj, axis=1)
    d_inv_sqrt = jnp.where(degree > 0, lax.rsqrt(degree), 0.0)
    anorm = adj * d_inv_sqrt[:, None] * d_inv_sqrt[None, :]

    # --- lane-dense RHS: contract node axis N against a wide (B*C*F) axis ---
    # X_wide[m, (b, c, f)] = x[b, c, m, f]
    x_wide = jnp.transpose(x, (2, 0, 1, 3)).reshape(N, W)

    # --- tile sizes (256-multiples preferred for v6e/v7x MXU, 128 fallback) ---
    tm = _pick_tile(N, (512, 256, 128))
    tk = _pick_tile(N, (512, 256, 128))
    tw = _pick_tile(W, (2048, 1024, 512, 256, 128))

    grid = (N // tm, W // tw, N // tk)

    y_wide = pl.pallas_call(
        _gcn_matmul_kernel,
        out_shape=jax.ShapeDtypeStruct((N, W), x.dtype),
        grid_spec=pltpu.PrefetchScalarGridSpec(
            num_scalar_prefetch=0,
            grid=grid,
            in_specs=[
                pl.BlockSpec((tm, tk), lambda i, j, k: (i, k)),   # anorm tile
                pl.BlockSpec((tk, tw), lambda i, j, k: (k, j)),   # X_wide tile
            ],
            out_specs=pl.BlockSpec((tm, tw), lambda i, j, k: (i, j)),
            scratch_shapes=[pltpu.VMEM((tm, tw), jnp.float32)],
        ),
        compiler_params=pltpu.CompilerParams(
            dimension_semantics=("parallel", "parallel", "arbitrary"),
        ),
    )(anorm.astype(x.dtype), x_wide)

    # --- back to NCHW-style (B, C, N, F) ---
    return jnp.transpose(y_wide.reshape(N, B, C, F), (1, 2, 0, 3))


def _reference(x, adjmatrix):
    degree = adjmatrix.sum(axis=1)
    d = degree ** -0.5
    d = jnp.where(jnp.isinf(d), 0.0, d)
    anorm = adjmatrix * d[:, None] * d[None, :]
    return jnp.einsum("nm,bcmf->bcnf", anorm, x)


if __name__ == "__main__":
    key = jax.random.PRNGKey(0)
    k_adj, k_x = jax.random.split(key)

    B, C, N, F = 2, 4, 16, 16

    # Deterministic synthetic symmetric adjacency with self-loops.
    a = (jax.random.uniform(k_adj, (N, N)) > 0.7).astype(jnp.float32)
    adjmatrix = jnp.clip(a + a.T + jnp.eye(N, dtype=jnp.float32), 0.0, 1.0)

    x = jax.random.normal(k_x, (B, C, N, F), dtype=jnp.float32)

    y = gcn_conv2d(x, adjmatrix)
    y = jax.block_until_ready(y)

    y_ref = _reference(x, adjmatrix)
    assert y.shape == (B, C, N, F)
    assert jnp.allclose(y, y_ref, atol=1e-5, rtol=1e-5), "mismatch vs reference"

    print("KERNEL_OK")
</pallas_src>

<mosaic_0001>
module attributes {stable_mosaic.version = 11 : i64} {
  func.func @_gcn_matmul_kernel(%arg0: i32, %arg1: i32, %arg2: i32, %arg3: memref<16x16xf32, #tpu.memory_space<vmem>>, %arg4: memref<16x128xf32, #tpu.memory_space<vmem>>, %arg5: memref<16x128xf32, #tpu.memory_space<vmem>>, %arg6: memref<16x128xf32, #tpu.memory_space<vmem>>) attributes {dimension_semantics = [#tpu.dimension_semantics<parallel>, #tpu.dimension_semantics<parallel>, #tpu.dimension_semantics<arbitrary>], iteration_bounds = array<i64: 1, 1, 1>, scalar_prefetch = 0 : i64, scratch_operands = 1 : i64, tpu.core_type = #tpu.core_type<tc>, window_params = [{transform_indices = @transform_0, window_bounds = array<i64: 16, 16>}, {transform_indices = @transform_1, window_bounds = array<i64: 16, 128>}, {transform_indices = @transform_2, window_bounds = array<i64: 16, 128>}]} {
    %c0_i32 = arith.constant 0 : i32
    %0 = arith.cmpi eq, %arg2, %c0_i32 : i32
    %1 = arith.extui %0 : i1 to i32
    %c0_i32_0 = arith.constant 0 : i32
    %2 = arith.cmpi ne, %1, %c0_i32_0 : i32
    scf.if %2 {
      %cst_10 = arith.constant 0.000000e+00 : f32
      %12 = vector.broadcast %cst_10 : f32 to vector<16x128xf32>
      %c0_11 = arith.constant 0 : index
      %c0_12 = arith.constant 0 : index
      %13 = vector.load %arg6[%c0_11, %c0_12] : memref<16x128xf32, #tpu.memory_space<vmem>>, vector<16x128xf32>
      tpu.vector_store %arg6[%c0_11, %c0_12], %12 {strides = array<i32>} : memref<16x128xf32, #tpu.memory_space<vmem>>, vector<16x128xf32>,
    } else {
    }
    %c0 = arith.constant 0 : index
    %c0_1 = arith.constant 0 : index
    %3 = vector.load %arg6[%c0, %c0_1] : memref<16x128xf32, #tpu.memory_space<vmem>>, vector<16x128xf32>
    %c0_2 = arith.constant 0 : index
    %c0_3 = arith.constant 0 : index
    %4 = vector.load %arg3[%c0_2, %c0_3] : memref<16x16xf32, #tpu.memory_space<vmem>>, vector<16x16xf32>
    %c0_4 = arith.constant 0 : index
    %c0_5 = arith.constant 0 : index
    %5 = vector.load %arg4[%c0_4, %c0_5] : memref<16x128xf32, #tpu.memory_space<vmem>>, vector<16x128xf32>
    %cst = arith.constant dense<0.000000e+00> : vector<16x128xf32>
    %6 = tpu.matmul %4, %5, %cst {dimension_numbers = #tpu.dot_dimension_numbers<[1], [0], [0], [1], [0, 0, 1, 1], [], []>} : vector<16x16xf32>, vector<16x128xf32>, vector<16x128xf32> -> vector<16x128xf32>
    %7 = arith.addf %3, %6 : vector<16x128xf32>
    %c0_6 = arith.constant 0 : index
    %c0_7 = arith.constant 0 : index
    %8 = vector.load %arg6[%c0_6, %c0_7] : memref<16x128xf32, #tpu.memory_space<vmem>>, vector<16x128xf32>
    tpu.vector_store %arg6[%c0_6, %c0_7], %7 {strides = array<i32>} : memref<16x128xf32, #tpu.memory_space<vmem>>, vector<16x128xf32>,
    %c0_i32_8 = arith.constant 0 : i32
    %9 = arith.cmpi eq, %arg2, %c0_i32_8 : i32
    %10 = arith.extui %9 : i1 to i32
    %c0_i32_9 = arith.constant 0 : i32
    %11 = arith.cmpi ne, %10, %c0_i32_9 : i32
    scf.if %11 {
      %c0_10 = arith.constant 0 : index
      %c0_11 = arith.constant 0 : index
      %12 = vector.load %arg6[%c0_10, %c0_11] : memref<16x128xf32, #tpu.memory_space<vmem>>, vector<16x128xf32>
      %c0_12 = arith.constant 0 : index
      %c0_13 = arith.constant 0 : index
      %13 = vector.load %arg5[%c0_12, %c0_13] : memref<16x128xf32, #tpu.memory_space<vmem>>, vector<16x128xf32>
      tpu.vector_store %arg5[%c0_12, %c0_13], %12 {strides = array<i32>} : memref<16x128xf32, #tpu.memory_space<vmem>>, vector<16x128xf32>,
    } else {
    }
    return
  }
  func.func @transform_0(%arg0: i32, %arg1: i32, %arg2: i32) -> (i32, i32) {
    %c0_i32 = arith.constant 0 : i32
    return %arg0, %arg2 : i32, i32
  }
  func.func @transform_1(%arg0: i32, %arg1: i32, %arg2: i32) -> (i32, i32) {
    %c0_i32 = arith.constant 0 : i32
    return %arg2, %arg1 : i32, i32
  }
  func.func @transform_2(%arg0: i32, %arg1: i32, %arg2: i32) -> (i32, i32) {
    %c0_i32 = arith.constant 0 : i32
    return %arg0, %arg1 : i32, i32
  }
}

</mosaic_0001>

<llo_original>
// kernel: tpu_custom_call.1
$region0: #{tpu_custom_call.1}
  #allocation0 [shape = 'u32[]', space=smem, size = 0x4, offset = 0x4, fixed_abs, tag = 'smem constant byte address 0x4 - core index']
  #allocation1 [shape = 'u32[144,128]{1,0:T(1,128)}', space=vmem, size = 0x12000, scoped, tag = 'internal scratch']
  #allocation2 [shape = 'f32[16,128]{1,0:T(8,128)}', space=vmem, size = 0x2000, scoped, tag = 'scratch operand']
  %s0 = inlined_call_operand.hbm [shape: f32[16,16], index: 0, kind: input, shape index: {}]
  %s1 = inlined_call_operand.hbm [shape: f32[16,128], index: 1, kind: input, shape index: {}]
  %s2 = inlined_call_operand.hbm [shape: f32[16,128], index: 2, kind: output, shape index: {}]
  %s3 = sld [smem:[#allocation0]]
  $region34: #{tpu_custom_call.1} parent=0
    _
  %s5 = ssub.s32 1, %s3
  %s6 = scalar_select 0, %s5, %s3
  $region1: #{tpu_custom_call.1} parent=0
    #allocation3 [shape = 'u8[8192]{0}', space=vmem, size = 0x2000, scoped, tag = 'input window, operand 0, single buffered']
    #allocation4 [shape = 's32[1]{0}', space=sflag, size = 0x4, scoped, tag = 'scoped memory for tpu_custom_call.1']
    #allocation5 [shape = 's32[1]{0}', space=sflag, size = 0x4, scoped, tag = 'scoped memory for tpu_custom_call.1']
    #allocation6 [shape = 'u8[8192]{0}', space=vmem, size = 0x2000, scoped, tag = 'input window, operand 1, single buffered']
    #allocation7 [shape = 's32[1]{0}', space=sflag, size = 0x4, scoped, tag = 'scoped memory for tpu_custom_call.1']
    #allocation8 [shape = 'u8[8192]{0}', space=vmem, size = 0x2000, scoped, tag = 'output window, operand 0, single buffered']
    %7 = vsyncpa [#allocation4], 0
    %8 = vsyncpa [#allocation7], 0
    %9 = vsyncpa [#allocation5], 0
    // Predicated region
    $region2: #{tpu_custom_call.1} parent=1 // pred_check
      _
    $region3: #{tpu_custom_call.1} parent=1 // pred_check_branch
      %11 = sbr.rel (0) target = $region5
    $region4: #{tpu_custom_call.1} parent=1 // pred_region
      %s13 = ssub.s32 256, 256
      %14 = vsyncadd [#allocation4], %s13
      %s15 = sshll.u32 [#allocation3], 4
      %s16 = int_to_ptr.vmem [resolvable:$true] %s15
      %21 = dma.hbm_to_vmem [thread:$0]  %s0, 256, %s16, [#allocation4], 128, 128, 8
    $region5: #{tpu_custom_call.1} parent=1 // pred_fallthru
      _
    // Predicated region
    $region6: #{tpu_custom_call.1} parent=1 // pred_check
      _
    $region7: #{tpu_custom_call.1} parent=1 // pred_check_branch
      %23 = sbr.rel (0) target = $region9
    $region8: #{tpu_custom_call.1} parent=1 // pred_region
      %s25 = ssub.s32 256, 256
      %26 = vsyncadd [#allocation7], %s25
      %s27 = sshll.u32 [#allocation6], 4
      %s28 = int_to_ptr.vmem [resolvable:$true] %s27
      %33 = dma.hbm_to_vmem [thread:$0]  %s1, 256, %s28, [#allocation7], 128, 128, 8
    $region9: #{tpu_custom_call.1} parent=1 // pred_fallthru
      _
    // Predicated region
    $region10: #{tpu_custom_call.1} parent=1 // pred_check
      _
    $region11: #{tpu_custom_call.1} parent=1 // pred_check_branch
      %35 = sbr.rel (0) target = $region13
    $region12: #{tpu_custom_call.1} parent=1 // pred_region
      %36 = dma.done [#allocation4], 256
    $region13: #{tpu_custom_call.1} parent=1 // pred_fallthru
      _
    // Predicated region
    $region14: #{tpu_custom_call.1} parent=1 // pred_check
      _
    $region15: #{tpu_custom_call.1} parent=1 // pred_check_branch
      %38 = sbr.rel (0) target = $region17
    $region16: #{tpu_custom_call.1} parent=1 // pred_region
      %39 = dma.done [#allocation7], 256
    $region17: #{tpu_custom_call.1} parent=1 // pred_fallthru
      _
    %p40 = scmp.eq.s32.totalorder 0, 0
    // Predicated region
    $region18: #{tpu_custom_call.1} parent=1 // pred_check
      %p41 = pneg %p40
    $region19: #{tpu_custom_call.1} parent=1 // pred_check_branch
      %43 = sbr.rel (%p41) target = $region21
    $region20: #{tpu_custom_call.1} parent=1 // pred_region
      %44 = vst [vmem:[#allocation2] sm:$0xff] 0.0
      %45 = vst [vmem:[#allocation2 + $0x8] sm:$0xff] 0.0
    $region21: #{tpu_custom_call.1} parent=1 // pred_fallthru
      _
    %v46 = vld [vmem:[#allocation2] sm:$0xff]
    %v47 = vld [vmem:[#allocation2 + $0x8] sm:$0xff]
    %v48 = vld [vmem:[#allocation3] sm:$0xff]
    %v49 = vld [vmem:[#allocation3 + $0x8] sm:$0xff]
    %v50 = vld [vmem:[#allocation6] sm:$0xff]
    %v51 = vld [vmem:[#allocation6 + $0x8] sm:$0xff]
    %vm52 = vcmask 130048
    %v54 = vsel %vm52, %v48, 0
    %v57 = vsel %vm52, %v49, 0
    %59 = vmatprep.subr.mxu0 0.0
    %60 = vmatpush1.msra.mxu0 %v50
    %61 = vmatprep.subr.mxu0 0.0
    %62 = vmatpush1.msra.mxu0 %v51
    %63 = vmatprep.subr.mxu0 0.0
    %64 = vmatpush1.msra.mxu0 0.0
    %65 = vmatprep.subr.mxu0 0.0
    %66 = vmatpush1.msra.mxu0 0.0
    %67 = vmatprep.subr.mxu0 0.0
    %68 = vmatpush1.msra.mxu0 0.0
    %69 = vmatprep.subr.mxu0 0.0
    %70 = vmatpush1.msra.mxu0 0.0
    %71 = vmatprep.subr.mxu0 0.0
    %72 = vmatpush1.msra.mxu0 0.0
    %73 = vmatprep.subr.mxu0 0.0
    %74 = vmatpush1.msra.mxu0 0.0
    %75 = vmatprep.subr.mxu0 0.0
    %76 = vmatpush1.msra.mxu0 0.0
    %77 = vmatprep.subr.mxu0 0.0
    %78 = vmatpush1.msra.mxu0 0.0
    %79 = vmatprep.subr.mxu0 0.0
    %80 = vmatpush1.msra.mxu0 0.0
    %81 = vmatprep.subr.mxu0 0.0
    %82 = vmatpush1.msra.mxu0 0.0
    %83 = vmatprep.subr.mxu0 0.0
    %84 = vmatpush1.msra.mxu0 0.0
    %85 = vmatprep.subr.mxu0 0.0
    %86 = vmatpush1.msra.mxu0 0.0
    %87 = vmatprep.subr.mxu0 0.0
    %88 = vmatpush1.msra.mxu0 0.0
    %89 = vmatprep.subr.mxu0 0.0
    %90 = vmatpush1.msra.mxu0 0.0
    %91 = vmatprep.subr.mxu0 0.0
    %92 = vmatpush1.msra.mxu0 0.0
    %93 = vmatprep.subr.mxu0 0.0
    %94 = vmatpush1.msra.mxu0 0.0
    %95 = vmatprep.subr.mxu0 0.0
    %96 = vmatpush1.msra.mxu0 0.0
    %97 = vmatprep.subr.mxu0 0.0
    %98 = vmatpush1.msra.mxu0 0.0
    %99 = vmatprep.subr.mxu0 0.0
    %100 = vmatpush1.msra.mxu0 0.0
    %101 = vmatprep.subr.mxu0 0.0
    %102 = vmatpush1.msra.mxu0 0.0
    %103 = vmatprep.subr.mxu0 0.0
    %104 = vmatpush1.msra.mxu0 0.0
    %105 = vmatprep.subr.mxu0 0.0
    %106 = vmatpush1.msra.mxu0 0.0
    %107 = vmatprep.subr.mxu0 0.0
    %108 = vmatpush1.msra.mxu0 0.0
    %109 = vmatprep.subr.mxu0 0.0
    %110 = vmatpush1.msra.mxu0 0.0
    %111 = vmatprep.subr.mxu0 0.0
    %112 = vmatpush1.msra.mxu0 0.0
    %113 = vmatprep.subr.mxu0 0.0
    %114 = vmatpush1.msra.mxu0 0.0
    %115 = vmatprep.subr.mxu0 0.0
    %116 = vmatpush1.msra.mxu0 0.0
    %117 = vmatprep.subr.mxu0 0.0
    %118 = vmatpush1.msra.mxu0 0.0
    %119 = vmatprep.subr.mxu0 0.0
    %120 = vmatpush1.msra.mxu0 0.0
    %121 = vmatprep.subr.mxu0 0.0
    %122 = vmatpush1.msra.mxu0 0.0
    %123 = vmatprep.mubr.f32.mxu0 0.0
    %124 = vmatmul.mubr.f32.gmra.mrb[0].mxu0 %v54
    %v125 = vpop.f32.mrb[0].mxu0
    %v126 = vadd.f32 0.0, %v125
    %v127 = vpop.f32.mrb[0].mxu0
    %128 = vmatprep.mubr.f32.mxu0 0.0
    %129 = vmatmul.mubr.f32.gmra.mrb[0].mxu0 %v57
    %v130 = vpop.f32.mrb[0].mxu0
    %v131 = vadd.f32 0.0, %v130
    %v132 = vpop.f32.mrb[0].mxu0
    %133 = vdwg.mxu0
    %v134 = vadd.f32 %v46, %v126
    %v135 = vadd.f32 %v47, %v131
    %136 = vst [vmem:[#allocation2] sm:$0xff] %v134
    %137 = vst [vmem:[#allocation2 + $0x8] sm:$0xff] %v135
    // Predicated region
    $region22: #{tpu_custom_call.1} parent=1 // pred_check
      %p138 = pneg %p40
    $region23: #{tpu_custom_call.1} parent=1 // pred_check_branch
      %140 = sbr.rel (%p138) target = $region25
    $region24: #{tpu_custom_call.1} parent=1 // pred_region
      %v141 = vld [vmem:[#allocation2] sm:$0xff]
      %v142 = vld [vmem:[#allocation2 + $0x8] sm:$0xff]
      %143 = vst [vmem:[#allocation8] sm:$0xff] %v141
      %144 = vst [vmem:[#allocation8 + $0x8] sm:$0xff] %v142
    $region25: #{tpu_custom_call.1} parent=1 // pred_fallthru
      _
    // Predicated region
    $region26: #{tpu_custom_call.1} parent=1 // pred_check
      _
    $region27: #{tpu_custom_call.1} parent=1 // pred_check_branch
      %146 = sbr.rel (0) target = $region29
    $region28: #{tpu_custom_call.1} parent=1 // pred_region
      %s148 = ssub.s32 256, 256
      %149 = vsyncadd [#allocation5], %s148
      %s150 = sshll.u32 [#allocation8], 4
      %s151 = int_to_ptr.vmem [resolvable:$true] %s150
      %156 = dma.vmem_to_hbm [thread:$0]  %s151, 256, %s2, [#allocation5], 128, 128, 8
    $region29: #{tpu_custom_call.1} parent=1 // pred_fallthru
      _
    // Predicated region
    $region30: #{tpu_custom_call.1} parent=1 // pred_check
      _
    $region31: #{tpu_custom_call.1} parent=1 // pred_check_branch
      %158 = sbr.rel (0) target = $region33
    $region32: #{tpu_custom_call.1} parent=1 // pred_region
      %159 = dma.done [#allocation5], 256
    $region33: #{tpu_custom_call.1} parent=1 // pred_fallthru
      _
    %160 = vsyncpa [#allocation4], 1
    %161 = vsyncpa [#allocation7], 1
    %162 = vsyncpa [#allocation5], 1

</llo_original>
